<compile_context>
chip_gen: v7x
topology: tpu7x:2x2x1
jax: 0.10.0
libtpu: 0.0.40
codegen_flags: <defaults>
</compile_context>

<pallas_src>
import math

import jax
import jax.numpy as jnp
from jax.experimental import pallas as pl
from jax.experimental.pallas import tpu as pltpu


_LANE_CANDIDATES = (1024, 512, 256, 128)  # lane-dense widths (multiples of 128)
_BLOCK_BYTES = 4 << 20                    # ~4 MiB per tile buffer, dtype-agnostic


def _copy_tile_kernel(x_ref, o_ref):
    # Pure copy; the "squeeze" itself is shape plumbing in the wrapper
    # (a size-1 axis carries no data).
    o_ref[...] = x_ref[...]


def _sublane_pack(dtype) -> int:
    # Sublane packing multiple: 8 for 4-byte, 16 for 2-byte, 32 for 1-byte dtypes.
    return max(8, 32 // jnp.dtype(dtype).itemsize)


def _pick_block_rows(rows: int, lanes: int, dtype) -> int:
    """Byte-budgeted row-block size, sublane-pack aligned, >=2 grid steps when possible."""
    pack = _sublane_pack(dtype)
    itemsize = jnp.dtype(dtype).itemsize
    budget = max(pack, (_BLOCK_BYTES // (lanes * itemsize)) // pack * pack)
    if rows <= budget:
        if rows >= 2 * pack:
            # Whole array fits one block: split into two so both TensorCores
            # on a v7x chip get a grid step (no effect on 1-TC v5e/v6e).
            half = pl.cdiv(rows, 2)
            return ((half + pack - 1) // pack) * pack
        # Tiny input: one full-dim block (satisfies the "block equals full
        # array dim" exception to the (8, 128) rule even when rows < 8).
        return rows
    return budget


def _tiled_copy(x2: jax.Array, block_rows: int, lanes: int,
                allow_fusion: bool = False) -> jax.Array:
    rows = x2.shape[0]
    grid = pl.cdiv(rows, block_rows)
    params = dict(
        dimension_semantics=("parallel",),
        vmem_limit_bytes=32 << 20,  # 2 x 2 x 4 MiB tiles leave headroom everywhere
    )
    if allow_fusion:
        # Only used on the (rare) padded fallback path so XLA can fuse the pad
        # into the pallas_call input instead of materializing a padded buffer.
        params["allow_input_fusion"] = [True]
    return pl.pallas_call(
        _copy_tile_kernel,
        out_shape=jax.ShapeDtypeStruct((rows, lanes), x2.dtype),
        grid_spec=pltpu.PrefetchScalarGridSpec(
            num_scalar_prefetch=0,
            grid=(grid,),
            in_specs=[pl.BlockSpec((block_rows, lanes), lambda i: (i, 0))],
            out_specs=pl.BlockSpec((block_rows, lanes), lambda i: (i, 0)),
        ),
        compiler_params=pltpu.CompilerParams(**params),
    )(x2)


def squeeze(x: jax.Array, dim: int = -1) -> jax.Array:
    """torch.squeeze(x, dim) semantics.

    Metadata-only fast path: removing a size-1 axis moves no data, so this is
    a free reshape/view in XLA (no Pallas kernel, no HBM traffic).  Prefer this.
    """
    d = dim % x.ndim
    if x.shape[d] != 1:
        return x  # torch.squeeze with an explicit dim is a no-op if that dim != 1
    return jnp.squeeze(x, axis=d)


def squeeze_pallas(x: jax.Array, dim: int = -1) -> jax.Array:
    """Same semantics, materialized through a lane-dense tiled Pallas copy."""
    d = dim % x.ndim
    if x.shape[d] != 1:
        return x  # no-op path, no kernel
    out_shape = tuple(s for i, s in enumerate(x.shape) if i != d)
    total = math.prod(out_shape) if out_shape else 1

    # Main path: pick the widest lane count that divides numel -> no pad, no
    # output slice, reshapes in/out of the 2-D slab are free views.
    lanes = next((c for c in _LANE_CANDIDATES if total % c == 0), None)
    if lanes is not None:
        rows = total // lanes
        x2 = x.reshape(rows, lanes)                 # metadata-only
        block_rows = _pick_block_rows(rows, lanes, x.dtype)
        out2 = _tiled_copy(x2, block_rows, lanes)
        return out2.reshape(out_shape)              # metadata-only

    # Fallback (numel not a multiple of 128): pad the flat tail to a lane-dense
    # slab.  allow_input_fusion lets XLA fuse the pad into the call input.
    lanes = 128
    rows = max(1, pl.cdiv(total, lanes))
    padded_total = rows * lanes
    flat = x.reshape(-1)
    flat = jnp.pad(flat, (0, padded_total - total))
    x2 = flat.reshape(rows, lanes)
    block_rows = _pick_block_rows(rows, lanes, x.dtype)
    out2 = _tiled_copy(x2, block_rows, lanes, allow_fusion=True)
    # TODO(synk): the output-side slice below still costs one extra HBM round
    # trip; it is only hit when numel % 128 != 0 (prefer `squeeze()` there).
    return out2.reshape(-1)[:total].reshape(out_shape)


if __name__ == "__main__":
    key = jax.random.PRNGKey(0)
    k0, k1, k2, k3, k4, k5 = jax.random.split(key, 6)

    # 1) Shape consistent with Squeeze(dim=-1): NCHW-ish tensor with trailing 1.
    x = jax.random.normal(k0, (2, 4, 16, 1), dtype=jnp.float32)
    ref = jnp.squeeze(x, axis=-1)
    y_fast = jax.block_until_ready(squeeze(x, dim=-1))
    assert y_fast.shape == (2, 4, 16) and jnp.array_equal(y_fast, ref)
    y_kernel = jax.block_until_ready(squeeze_pallas(x, dim=-1))
    assert y_kernel.shape == (2, 4, 16) and jnp.array_equal(y_kernel, ref)

    # 2) Larger divisible shape: multi-row slab, grid split into 2 parallel steps.
    xb = jax.random.normal(k1, (8, 64, 128, 1), dtype=jnp.float32)
    yb = jax.block_until_ready(squeeze_pallas(xb, dim=-1))
    assert yb.shape == (8, 64, 128) and jnp.array_equal(yb, jnp.squeeze(xb, -1))

    # 3) Ragged final row-block (rows=24, block_rows=16) exercises boundary masking.
    xr = jax.random.normal(k2, (3, 8, 1024, 1), dtype=jnp.float32)
    yr = jax.block_until_ready(squeeze_pallas(xr, dim=-1))
    assert yr.shape == (3, 8, 1024) and jnp.array_equal(yr, jnp.squeeze(xr, -1))

    # 4) bf16: byte-budgeted blocks keep DMAs large; pack multiple becomes 16.
    xh = jax.random.normal(k3, (32, 64, 64, 1), dtype=jnp.bfloat16)
    yh = jax.block_until_ready(squeeze_pallas(xh, dim=-1))
    assert yh.shape == (32, 64, 64) and jnp.array_equal(yh, jnp.squeeze(xh, -1))

    # 5) Non-trailing dim squeeze.
    xm = jax.random.normal(k4, (2, 1, 16, 8), dtype=jnp.float32)
    ym = jax.block_until_ready(squeeze_pallas(xm, dim=1))
    assert ym.shape == (2, 16, 8) and jnp.array_equal(ym, jnp.squeeze(xm, axis=1))

    # 6) Fallback path: numel (105) not a multiple of 128.
    xf = jax.random.normal(k5, (3, 5, 7, 1), dtype=jnp.float32)
    yf = jax.block_until_ready(squeeze_pallas(xf, dim=-1))
    assert yf.shape == (3, 5, 7) and jnp.array_equal(yf, jnp.squeeze(xf, -1))

    # 7) No-op path (dim size != 1): return unchanged, no kernel.
    z = jax.random.normal(k0, (2, 4, 16, 16), dtype=jnp.float32)
    y_noop = jax.block_until_ready(squeeze_pallas(z, dim=-1))
    assert y_noop.shape == z.shape and jnp.array_equal(y_noop, z)

    print("KERNEL_OK")
</pallas_src>

<mosaic_0001>
module attributes {stable_mosaic.version = 11 : i64} {
  func.func @_copy_tile_kernel(%arg0: i32, %arg1: memref<1x128xf32, #tpu.memory_space<vmem>>, %arg2: memref<1x128xf32, #tpu.memory_space<vmem>>) attributes {dimension_semantics = [#tpu.dimension_semantics<parallel>], iteration_bounds = array<i64: 1>, scalar_prefetch = 0 : i64, scratch_operands = 0 : i64, tpu.core_type = #tpu.core_type<tc>, window_params = [{transform_indices = @transform_0, window_bounds = array<i64: 1, 128>}, {transform_indices = @transform_1, window_bounds = array<i64: 1, 128>}]} {
    %c0 = arith.constant 0 : index
    %c0_0 = arith.constant 0 : index
    %0 = vector.load %arg1[%c0, %c0_0] : memref<1x128xf32, #tpu.memory_space<vmem>>, vector<1x128xf32>
    %c0_1 = arith.constant 0 : index
    %c0_2 = arith.constant 0 : index
    %1 = vector.load %arg2[%c0_1, %c0_2] : memref<1x128xf32, #tpu.memory_space<vmem>>, vector<1x128xf32>
    tpu.vector_store %arg2[%c0_1, %c0_2], %0 {strides = array<i32>} : memref<1x128xf32, #tpu.memory_space<vmem>>, vector<1x128xf32>,
    return
  }
  func.func @transform_0(%arg0: i32) -> (i32, i32) {
    %c0_i32 = arith.constant 0 : i32
    %c0_i32_0 = arith.constant 0 : i32
    return %arg0, %c0_i32 : i32, i32
  }
  func.func @transform_1(%arg0: i32) -> (i32, i32) {
    %c0_i32 = arith.constant 0 : i32
    %c0_i32_0 = arith.constant 0 : i32
    return %arg0, %c0_i32 : i32, i32
  }
}

</mosaic_0001>

<llo_original>
// kernel: tpu_custom_call.1
$region0: #{tpu_custom_call.1}
  #allocation0 [shape = 'u32[]', space=smem, size = 0x4, offset = 0x4, fixed_abs, tag = 'smem constant byte address 0x4 - core index']
  #allocation1 [shape = 'u32[144,128]{1,0:T(1,128)}', space=vmem, size = 0x12000, scoped, tag = 'internal scratch']
  %s0 = inlined_call_operand.hbm [shape: f32[1,128], index: 0, kind: input, shape index: {}]
  %s1 = inlined_call_operand.hbm [shape: f32[1,128], index: 1, kind: output, shape index: {}]
  %s2 = sld [smem:[#allocation0]]
  $region18: #{tpu_custom_call.1} parent=0
    _
  %s4 = ssub.s32 1, %s2
  %s5 = scalar_select 0, %s4, %s2
  $region1: #{tpu_custom_call.1} parent=0
    #allocation2 [shape = 'u8[512]{0}', space=vmem, size = 0x400, scoped, tag = 'input window, operand 0, single buffered']
    #allocation3 [shape = 's32[1]{0}', space=sflag, size = 0x4, scoped, tag = 'scoped memory for tpu_custom_call.1']
    #allocation4 [shape = 's32[1]{0}', space=sflag, size = 0x4, scoped, tag = 'scoped memory for tpu_custom_call.1']
    #allocation5 [shape = 'u8[512]{0}', space=vmem, size = 0x400, scoped, tag = 'output window, operand 0, single buffered']
    %6 = vsyncpa [#allocation3], 0
    %7 = vsyncpa [#allocation4], 0
    // Predicated region
    $region2: #{tpu_custom_call.1} parent=1 // pred_check
      _
    $region3: #{tpu_custom_call.1} parent=1 // pred_check_branch
      %9 = sbr.rel (0) target = $region5
    $region4: #{tpu_custom_call.1} parent=1 // pred_region
      %s11 = ssub.s32 16, 16
      %12 = vsyncadd [#allocation3], %s11
      %s14 = sshll.u32 [#allocation2], 4
      %s15 = int_to_ptr.vmem [resolvable:$true] %s14
      %17 = dma.hbm_to_vmem [thread:$0]  %s0, 16, %s15, [#allocation3]
    $region5: #{tpu_custom_call.1} parent=1 // pred_fallthru
      _
    // Predicated region
    $region6: #{tpu_custom_call.1} parent=1 // pred_check
      _
    $region7: #{tpu_custom_call.1} parent=1 // pred_check_branch
      %19 = sbr.rel (0) target = $region9
    $region8: #{tpu_custom_call.1} parent=1 // pred_region
      %20 = dma.done [#allocation3], 16
    $region9: #{tpu_custom_call.1} parent=1 // pred_fallthru
      _
    %v21 = vld [vmem:[#allocation2] sm:$0x1]
    %22 = vst [vmem:[#allocation5] sm:$0x1] %v21
    // Predicated region
    $region10: #{tpu_custom_call.1} parent=1 // pred_check
      _
    $region11: #{tpu_custom_call.1} parent=1 // pred_check_branch
      %24 = sbr.rel (0) target = $region13
    $region12: #{tpu_custom_call.1} parent=1 // pred_region
      %s26 = ssub.s32 16, 16
      %27 = vsyncadd [#allocation4], %s26
      %s29 = sshll.u32 [#allocation5], 4
      %s30 = int_to_ptr.vmem [resolvable:$true] %s29
      %32 = dma.vmem_to_hbm [thread:$0]  %s30, 16, %s1, [#allocation4]
    $region13: #{tpu_custom_call.1} parent=1 // pred_fallthru
      _
    // Predicated region
    $region14: #{tpu_custom_call.1} parent=1 // pred_check
      _
    $region15: #{tpu_custom_call.1} parent=1 // pred_check_branch
      %34 = sbr.rel (0) target = $region17
    $region16: #{tpu_custom_call.1} parent=1 // pred_region
      %35 = dma.done [#allocation4], 16
    $region17: #{tpu_custom_call.1} parent=1 // pred_fallthru
      _
    %36 = vsyncpa [#allocation3], 1
    %37 = vsyncpa [#allocation4], 1

</llo_original>
